<compile_context>
chip_gen: v7x
topology: tpu7x:2x2x1
jax: 0.10.0
libtpu: 0.0.40
codegen_flags: <defaults>
</compile_context>

<pallas_src>
import jax
import jax.numpy as jnp
from jax.experimental import pallas as pl
from jax.experimental.pallas import tpu as pltpu

LANE = 128
HID1 = 15
HID2 = 100


def _round_up(x, m):
    return ((x + m - 1) // m) * m


def mlp_softmax_kernel(x_ref, w1_ref, b1_ref, w2_ref, b2_ref, w3_ref, b3_ref, o_ref):
    """One batch tile of the fused MLP + softmax. Weights are VMEM-resident."""
    x = x_ref[...]

    # Linear(in_dim, 15) + ReLU
    h1 = jnp.dot(x, w1_ref[...], preferred_element_type=jnp.float32) + b1_ref[...]
    h1 = jnp.maximum(h1, 0.0)

    # Linear(15, 100) + ReLU
    h2 = jnp.dot(h1, w2_ref[...], preferred_element_type=jnp.float32) + b2_ref[...]
    h2 = jnp.maximum(h2, 0.0)

    # Linear(100, 128-padded out_dim). Padding columns carry bias = -1e30 so their
    # softmax contribution is exactly zero (exp underflows to 0, max is over real cols).
    logits = jnp.dot(h2, w3_ref[...], preferred_element_type=jnp.float32) + b3_ref[...]

    # Numerically-stable softmax over the feature axis (dim=1).
    m = jnp.max(logits, axis=-1, keepdims=True)
    e = jnp.exp(logits - m)
    denom = jnp.sum(e, axis=-1, keepdims=True)
    probs = e * pl.reciprocal(denom, approx=False)

    # Narrow store: only the real out_dim columns are written to HBM (the output
    # block's last dim equals the full array width). The 128-lane padding never
    # leaves VMEM.
    o_ref[...] = probs[:, : o_ref.shape[-1]].astype(o_ref.dtype)


def prepare_params(params):
    """One-time weight prep: f32 casts + lane-padding of the last linear layer.

    Hoisted out of the forward hot path so each call reuses the padded weights.
    """
    out_dim = params["w3"].shape[1]
    n_pad = max(LANE, _round_up(out_dim, LANE))
    w3p = jnp.zeros((HID2, n_pad), jnp.float32).at[:, :out_dim].set(
        params["w3"].astype(jnp.float32))
    b3p = jnp.full((1, n_pad), -1e30, jnp.float32).at[:, :out_dim].set(
        params["b3"].astype(jnp.float32))
    return {
        "w1": params["w1"].astype(jnp.float32),
        "b1": params["b1"].astype(jnp.float32),
        "w2": params["w2"].astype(jnp.float32),
        "b2": params["b2"].astype(jnp.float32),
        "w3p": w3p,
        "b3p": b3p,
        "out_dim": out_dim,
    }


def net_forward(x, prepared, *, tb=2048):
    """Runs the fused MLP+softmax Pallas kernel.

    x:        (batch, in_dim) float32
    prepared: output of prepare_params()
    tb:       batch tile size (clamped to a multiple of 8, max 4096).
    """
    batch, in_dim = x.shape
    out_dim = prepared["out_dim"]
    n_pad = prepared["w3p"].shape[1]
    x = x.astype(jnp.float32)

    # --- Batch tiling: no input pad; Pallas masks the edge block. Garbage rows in
    # the partial last block are row-independent and their stores are dropped.
    tb = max(8, (int(tb) // 8) * 8)
    tb = min(tb, _round_up(batch, 8))
    tb = min(tb, 4096)                       # VMEM headroom on v7x (64 MiB/TC)
    grid = (pl.cdiv(batch, tb),)

    w1, b1 = prepared["w1"], prepared["b1"]
    w2, b2 = prepared["w2"], prepared["b2"]
    w3p, b3p = prepared["w3p"], prepared["b3p"]

    def full_spec(arr):
        # Full-array block, constant index_map -> stays resident, no per-step re-DMA.
        return pl.BlockSpec(arr.shape, lambda i: (0,) * arr.ndim)

    # VMEM budget with lane-padded widths (intermediates live padded to 128 lanes).
    in_vpad = _round_up(in_dim, LANE)
    io_bytes = 2 * 4 * tb * (in_vpad + n_pad)            # double-buffered x + out tiles
    wt_bytes = 4 * (_round_up(in_dim, 8) * LANE + LANE
                    + _round_up(HID1, 8) * LANE + LANE
                    + _round_up(HID2, 8) * n_pad + n_pad)
    act_bytes = 4 * tb * (4 * LANE)                      # h1, h2, logits, e (padded)
    vmem_limit = int(min(max(2 * (io_bytes + wt_bytes + act_bytes), 16 << 20), 32 << 20))

    flops = 2 * batch * (in_dim * HID1 + HID1 * HID2 + HID2 * n_pad)
    bytes_accessed = 4 * batch * (in_dim + out_dim) + wt_bytes
    cost = pl.CostEstimate(flops=flops,
                           transcendentals=batch * n_pad,
                           bytes_accessed=bytes_accessed)

    out = pl.pallas_call(
        mlp_softmax_kernel,
        out_shape=jax.ShapeDtypeStruct((batch, out_dim), jnp.float32),
        grid=grid,
        in_specs=[
            pl.BlockSpec((tb, in_dim), lambda i: (i, 0)),   # x: tiled over batch
            full_spec(w1), full_spec(b1),
            full_spec(w2), full_spec(b2),
            full_spec(w3p), full_spec(b3p),
        ],
        # Narrow, lane-masked output store: block last dim == full array width.
        out_specs=pl.BlockSpec((tb, out_dim), lambda i: (i, 0)),
        compiler_params=pltpu.CompilerParams(
            dimension_semantics=("parallel",),
            vmem_limit_bytes=vmem_limit,
        ),
        cost_estimate=cost,
    )(x, w1, b1, w2, b2, w3p, b3p)

    return out


def init_params(key, in_dim, out_dim):
    """Deterministic synthetic init (PyTorch-Linear-like scaling, 1/sqrt(fan_in))."""
    ks = jax.random.split(key, 6)

    def linear(kw, kb, fan_in, fan_out):
        bound = 1.0 / jnp.sqrt(jnp.float32(fan_in))
        w = jax.random.uniform(kw, (fan_in, fan_out), jnp.float32, -bound, bound)
        b = jax.random.uniform(kb, (1, fan_out), jnp.float32, -bound, bound)
        return w, b

    w1, b1 = linear(ks[0], ks[1], in_dim, HID1)
    w2, b2 = linear(ks[2], ks[3], HID1, HID2)
    w3, b3 = linear(ks[4], ks[5], HID2, out_dim)
    return {"w1": w1, "b1": b1, "w2": w2, "b2": b2, "w3": w3, "b3": b3}


def _reference(x, params):
    h1 = jnp.maximum(x @ params["w1"] + params["b1"], 0.0)
    h2 = jnp.maximum(h1 @ params["w2"] + params["b2"], 0.0)
    logits = h2 @ params["w3"] + params["b3"]
    return jax.nn.softmax(logits, axis=1)


if __name__ == "__main__":
    key = jax.random.PRNGKey(0)
    k_x, k_x2, k_p = jax.random.split(key, 3)

    in_dim, out_dim = 8, 4
    params = init_params(k_p, in_dim, out_dim)
    prepared = prepare_params(params)   # one-time weight prep, reused across calls

    # Small sanity-check shape (single partial tile).
    batch = 4
    x = jax.random.normal(k_x, (batch, in_dim), dtype=jnp.float32)
    out = jax.block_until_ready(net_forward(x, prepared))
    ref = _reference(x, params)
    assert out.shape == (batch, out_dim)
    assert jnp.allclose(out, ref, atol=1e-5, rtol=1e-5)
    assert jnp.allclose(jnp.sum(out, axis=1), 1.0, atol=1e-5)

    # Multi-tile path with a batch remainder (exercises grid + masked edge block).
    batch2 = 600
    x2 = jax.random.normal(k_x2, (batch2, in_dim), dtype=jnp.float32)
    out2 = jax.block_until_ready(net_forward(x2, prepared, tb=256))
    ref2 = _reference(x2, params)
    assert out2.shape == (batch2, out_dim)
    assert jnp.allclose(out2, ref2, atol=1e-5, rtol=1e-5)
    assert jnp.allclose(jnp.sum(out2, axis=1), 1.0, atol=1e-5)

    print("KERNEL_OK")
</pallas_src>

<mosaic_0001>
module attributes {stable_mosaic.version = 11 : i64} {
  func.func @mlp_softmax_kernel(%arg0: i32, %arg1: memref<8x8xf32, #tpu.memory_space<vmem>>, %arg2: memref<8x15xf32, #tpu.memory_space<vmem>>, %arg3: memref<1x15xf32, #tpu.memory_space<vmem>>, %arg4: memref<15x100xf32, #tpu.memory_space<vmem>>, %arg5: memref<1x100xf32, #tpu.memory_space<vmem>>, %arg6: memref<100x128xf32, #tpu.memory_space<vmem>>, %arg7: memref<1x128xf32, #tpu.memory_space<vmem>>, %arg8: memref<8x4xf32, #tpu.memory_space<vmem>>) attributes {dimension_semantics = [#tpu.dimension_semantics<parallel>], iteration_bounds = array<i64: 1>, scalar_prefetch = 0 : i64, scratch_operands = 0 : i64, tpu.core_type = #tpu.core_type<tc>, window_params = [{transform_indices = @transform_0, window_bounds = array<i64: 8, 8>}, {pipeline_mode = #tpu.pipeline_mode<synchronous>, transform_indices = @transform_1, window_bounds = array<i64: 8, 15>}, {pipeline_mode = #tpu.pipeline_mode<synchronous>, transform_indices = @transform_2, window_bounds = array<i64: 1, 15>}, {pipeline_mode = #tpu.pipeline_mode<synchronous>, transform_indices = @transform_3, window_bounds = array<i64: 15, 100>}, {pipeline_mode = #tpu.pipeline_mode<synchronous>, transform_indices = @transform_4, window_bounds = array<i64: 1, 100>}, {pipeline_mode = #tpu.pipeline_mode<synchronous>, transform_indices = @transform_5, window_bounds = array<i64: 100, 128>}, {pipeline_mode = #tpu.pipeline_mode<synchronous>, transform_indices = @transform_6, window_bounds = array<i64: 1, 128>}, {transform_indices = @transform_7, window_bounds = array<i64: 8, 4>}]} {
    %c0 = arith.constant 0 : index
    %c0_0 = arith.constant 0 : index
    %0 = vector.load %arg1[%c0, %c0_0] : memref<8x8xf32, #tpu.memory_space<vmem>>, vector<8x8xf32>
    %c0_1 = arith.constant 0 : index
    %c0_2 = arith.constant 0 : index
    %1 = vector.load %arg2[%c0_1, %c0_2] : memref<8x15xf32, #tpu.memory_space<vmem>>, vector<8x15xf32>
    %cst = arith.constant dense<0.000000e+00> : vector<8x15xf32>
    %2 = tpu.matmul %0, %1, %cst {dimension_numbers = #tpu.dot_dimension_numbers<[1], [0], [0], [1], [0, 0, 1, 1], [], []>} : vector<8x8xf32>, vector<8x15xf32>, vector<8x15xf32> -> vector<8x15xf32>
    %c0_3 = arith.constant 0 : index
    %c0_4 = arith.constant 0 : index
    %3 = vector.load %arg3[%c0_3, %c0_4] : memref<1x15xf32, #tpu.memory_space<vmem>>, vector<1x15xf32>
    %4 = vector.broadcast %3 : vector<1x15xf32> to vector<8x15xf32>
    %5 = arith.addf %2, %4 : vector<8x15xf32>
    %cst_5 = arith.constant 0.000000e+00 : f32
    %6 = vector.broadcast %cst_5 : f32 to vector<8x15xf32>
    %7 = arith.maximumf %5, %6 : vector<8x15xf32>
    %c0_6 = arith.constant 0 : index
    %c0_7 = arith.constant 0 : index
    %8 = vector.load %arg4[%c0_6, %c0_7] : memref<15x100xf32, #tpu.memory_space<vmem>>, vector<15x100xf32>
    %cst_8 = arith.constant dense<0.000000e+00> : vector<8x100xf32>
    %9 = tpu.matmul %7, %8, %cst_8 {dimension_numbers = #tpu.dot_dimension_numbers<[1], [0], [0], [1], [0, 0, 1, 1], [], []>} : vector<8x15xf32>, vector<15x100xf32>, vector<8x100xf32> -> vector<8x100xf32>
    %c0_9 = arith.constant 0 : index
    %c0_10 = arith.constant 0 : index
    %10 = vector.load %arg5[%c0_9, %c0_10] : memref<1x100xf32, #tpu.memory_space<vmem>>, vector<1x100xf32>
    %11 = vector.broadcast %10 : vector<1x100xf32> to vector<8x100xf32>
    %12 = arith.addf %9, %11 : vector<8x100xf32>
    %cst_11 = arith.constant 0.000000e+00 : f32
    %13 = vector.broadcast %cst_11 : f32 to vector<8x100xf32>
    %14 = arith.maximumf %12, %13 : vector<8x100xf32>
    %c0_12 = arith.constant 0 : index
    %c0_13 = arith.constant 0 : index
    %15 = vector.load %arg6[%c0_12, %c0_13] : memref<100x128xf32, #tpu.memory_space<vmem>>, vector<100x128xf32>
    %cst_14 = arith.constant dense<0.000000e+00> : vector<8x128xf32>
    %16 = tpu.matmul %14, %15, %cst_14 {dimension_numbers = #tpu.dot_dimension_numbers<[1], [0], [0], [1], [0, 0, 1, 1], [], []>} : vector<8x100xf32>, vector<100x128xf32>, vector<8x128xf32> -> vector<8x128xf32>
    %c0_15 = arith.constant 0 : index
    %c0_16 = arith.constant 0 : index
    %17 = vector.load %arg7[%c0_15, %c0_16] : memref<1x128xf32, #tpu.memory_space<vmem>>, vector<1x128xf32>
    %18 = vector.broadcast %17 : vector<1x128xf32> to vector<8x128xf32>
    %19 = arith.addf %16, %18 : vector<8x128xf32>
    %cst_17 = arith.constant dense<0xFF800000> : vector<8xf32>
    %20 = vector.multi_reduction <maximumf>, %19, %cst_17 [1] : vector<8x128xf32> to vector<8xf32>
    %21 = vector.shape_cast %20 : vector<8xf32> to vector<8x1xf32>
    %22 = vector.broadcast %21 : vector<8x1xf32> to vector<8x128xf32>
    %23 = arith.subf %19, %22 : vector<8x128xf32>
    %24 = math.exp %23 : vector<8x128xf32>
    %cst_18 = arith.constant dense<0.000000e+00> : vector<8xf32>
    %25 = vector.multi_reduction <add>, %24, %cst_18 [1] : vector<8x128xf32> to vector<8xf32>
    %26 = vector.shape_cast %25 : vector<8xf32> to vector<8x1xf32>
    %27 = tpu.reciprocal %26 : vector<8x1xf32> -> vector<8x1xf32>
    %28 = vector.broadcast %27 : vector<8x1xf32> to vector<8x128xf32>
    %29 = arith.mulf %24, %28 : vector<8x128xf32>
    %30 = vector.extract_strided_slice %29 {offsets = [0, 0], sizes = [8, 4], strides = [1, 1]} : vector<8x128xf32> to vector<8x4xf32>
    %c0_19 = arith.constant 0 : index
    %c0_20 = arith.constant 0 : index
    %31 = vector.load %arg8[%c0_19, %c0_20] : memref<8x4xf32, #tpu.memory_space<vmem>>, vector<8x4xf32>
    tpu.vector_store %arg8[%c0_19, %c0_20], %30 {strides = array<i32>} : memref<8x4xf32, #tpu.memory_space<vmem>>, vector<8x4xf32>,
    return
  }
  func.func @transform_0(%arg0: i32) -> (i32, i32) {
    %c0_i32 = arith.constant 0 : i32
    %c0_i32_0 = arith.constant 0 : i32
    return %arg0, %c0_i32 : i32, i32
  }
  func.func @transform_1(%arg0: i32) -> (i32, i32) {
    %c0_i32 = arith.constant 0 : i32
    %c0_i32_0 = arith.constant 0 : i32
    %c0_i32_1 = arith.constant 0 : i32
    return %c0_i32, %c0_i32_0 : i32, i32
  }
  func.func @transform_2(%arg0: i32) -> (i32, i32) {
    %c0_i32 = arith.constant 0 : i32
    %c0_i32_0 = arith.constant 0 : i32
    %c0_i32_1 = arith.constant 0 : i32
    return %c0_i32, %c0_i32_0 : i32, i32
  }
  func.func @transform_3(%arg0: i32) -> (i32, i32) {
    %c0_i32 = arith.constant 0 : i32
    %c0_i32_0 = arith.constant 0 : i32
    %c0_i32_1 = arith.constant 0 : i32
    return %c0_i32, %c0_i32_0 : i32, i32
  }
  func.func @transform_4(%arg0: i32) -> (i32, i32) {
    %c0_i32 = arith.constant 0 : i32
    %c0_i32_0 = arith.constant 0 : i32
    %c0_i32_1 = arith.constant 0 : i32
    return %c0_i32, %c0_i32_0 : i32, i32
  }
  func.func @transform_5(%arg0: i32) -> (i32, i32) {
    %c0_i32 = arith.constant 0 : i32
    %c0_i32_0 = arith.constant 0 : i32
    %c0_i32_1 = arith.constant 0 : i32
    return %c0_i32, %c0_i32_0 : i32, i32
  }
  func.func @transform_6(%arg0: i32) -> (i32, i32) {
    %c0_i32 = arith.constant 0 : i32
    %c0_i32_0 = arith.constant 0 : i32
    %c0_i32_1 = arith.constant 0 : i32
    return %c0_i32, %c0_i32_0 : i32, i32
  }
  func.func @transform_7(%arg0: i32) -> (i32, i32) {
    %c0_i32 = arith.constant 0 : i32
    %c0_i32_0 = arith.constant 0 : i32
    return %arg0, %c0_i32 : i32, i32
  }
}

</mosaic_0001>

<llo_original>
// kernel: tpu_custom_call.1
$region0: #{tpu_custom_call.1}
  #allocation0 [shape = 'u32[]', space=smem, size = 0x4, offset = 0x4, fixed_abs, tag = 'smem constant byte address 0x4 - core index']
  #allocation1 [shape = 'u32[144,128]{1,0:T(1,128)}', space=vmem, size = 0x12000, scoped, tag = 'internal scratch']
  %s0 = inlined_call_operand.hbm [shape: f32[4,8], index: 0, kind: input, shape index: {}]
  %s1 = inlined_call_operand.hbm [shape: f32[8,15], index: 1, kind: input, shape index: {}]
  %s2 = inlined_call_operand.vmem [shape: f32[1,15], index: 2, kind: input, shape index: {}]
  %s3 = inlined_call_operand.hbm [shape: f32[15,100], index: 3, kind: input, shape index: {}]
  %s4 = inlined_call_operand.vmem [shape: f32[1,100], index: 4, kind: input, shape index: {}]
  %s5 = inlined_call_operand.hbm [shape: f32[100,128], index: 5, kind: input, shape index: {}]
  %s6 = inlined_call_operand.vmem [shape: f32[1,128], index: 6, kind: input, shape index: {}]
  %s7 = inlined_call_operand.hbm [shape: f32[4,4], index: 7, kind: output, shape index: {}]
  %s8 = sld [smem:[#allocation0]]
  $region54: #{tpu_custom_call.1} parent=0
    _
  %s10 = ssub.s32 1, %s8
  %s11 = scalar_select 0, %s10, %s8
  $region1: #{tpu_custom_call.1} parent=0
    #allocation2 [shape = 'u8[4096]{0}', space=vmem, size = 0x1000, scoped, tag = 'input window, operand 0, single buffered']
    #allocation3 [shape = 's32[1]{0}', space=sflag, size = 0x4, scoped, tag = 'scoped memory for tpu_custom_call.1']
    #allocation4 [shape = 's32[1]{0}', space=sflag, size = 0x4, scoped, tag = 'scoped memory for tpu_custom_call.1']
    #allocation5 [shape = 'u8[4096]{0}', space=vmem, size = 0x1000, scoped, tag = 'input window, operand 1, single buffered']
    #allocation6 [shape = 's32[1]{0}', space=sflag, size = 0x4, scoped, tag = 'scoped memory for tpu_custom_call.1']
    #allocation7 [shape = 'u8[8192]{0}', space=vmem, size = 0x2000, scoped, tag = 'input window, operand 3, single buffered']
    #allocation8 [shape = 'u8[53248]{0}', space=vmem, size = 0xd000, scoped, tag = 'input window, operand 5, single buffered']
    #allocation9 [shape = 's32[1]{0}', space=sflag, size = 0x4, scoped, tag = 'scoped memory for tpu_custom_call.1']
    #allocation10 [shape = 'u8[4096]{0}', space=vmem, size = 0x1000, scoped, tag = 'output window, operand 0, single buffered']
    %12 = vsyncpa [#allocation3], 0
    %13 = vsyncpa [#allocation6], 0
    %14 = vsyncpa [#allocation9], 0
    %15 = vsyncpa [#allocation4], 0
    // Predicated region
    $region2: #{tpu_custom_call.1} parent=1 // pred_check
      _
    $region3: #{tpu_custom_call.1} parent=1 // pred_check_branch
      %17 = sbr.rel (0) target = $region5
    $region4: #{tpu_custom_call.1} parent=1 // pred_region
      %s19 = ssub.s32 128, 64
      %20 = vsyncadd [#allocation3], %s19
      %s21 = sshll.u32 [#allocation2], 4
      %s22 = int_to_ptr.vmem [resolvable:$true] %s21
      %27 = dma.hbm_to_vmem [thread:$0]  %s0, 64, %s22, [#allocation3], 64, 64, 4
    $region5: #{tpu_custom_call.1} parent=1 // pred_fallthru
      _
    // Predicated region
    $region6: #{tpu_custom_call.1} parent=1 // pred_check
      _
    $region7: #{tpu_custom_call.1} parent=1 // pred_check_branch
      %29 = sbr.rel (0) target = $region9
    $region8: #{tpu_custom_call.1} parent=1 // pred_region
      %s31 = ssub.s32 128, 128
      %32 = vsyncadd [#allocation6], %s31
      %s34 = sshll.u32 [#allocation5], 4
      %s35 = int_to_ptr.vmem [resolvable:$true] %s34
      %37 = dma.hbm_to_vmem [thread:$0]  %s1, 128, %s35, [#allocation6]
    $region9: #{tpu_custom_call.1} parent=1 // pred_fallthru
      _
    // Predicated region
    $region10: #{tpu_custom_call.1} parent=1 // pred_check
      _
    $region11: #{tpu_custom_call.1} parent=1 // pred_check_branch
      %39 = sbr.rel (0) target = $region13
    $region12: #{tpu_custom_call.1} parent=1 // pred_region
      _
    $region13: #{tpu_custom_call.1} parent=1 // pred_fallthru
      _
    // Predicated region
    $region14: #{tpu_custom_call.1} parent=1 // pred_check
      _
    $region15: #{tpu_custom_call.1} parent=1 // pred_check_branch
      %41 = sbr.rel (0) target = $region17
    $region16: #{tpu_custom_call.1} parent=1 // pred_region
      %s43 = ssub.s32 256, 256
      %44 = vsyncadd [#allocation6], %s43
      %s45 = sshll.u32 [#allocation7], 4
      %s46 = int_to_ptr.vmem [resolvable:$true] %s45
      %51 = dma.hbm_to_vmem [thread:$0]  %s3, 256, %s46, [#allocation6], 128, 128, 8
    $region17: #{tpu_custom_call.1} parent=1 // pred_fallthru
      _
    // Predicated region
    $region18: #{tpu_custom_call.1} parent=1 // pred_check
      _
    $region19: #{tpu_custom_call.1} parent=1 // pred_check_branch
      %53 = sbr.rel (0) target = $region21
    $region20: #{tpu_custom_call.1} parent=1 // pred_region
      _
    $region21: #{tpu_custom_call.1} parent=1 // pred_fallthru
      _
    // Predicated region
    $region22: #{tpu_custom_call.1} parent=1 // pred_check
      _
    $region23: #{tpu_custom_call.1} parent=1 // pred_check_branch
      %55 = sbr.rel (0) target = $region25
    $region24: #{tpu_custom_call.1} parent=1 // pred_region
      %s57 = ssub.s32 1664, 1664
      %58 = vsyncadd [#allocation9], %s57
      %s59 = sshll.u32 [#allocation8], 4
      %s60 = int_to_ptr.vmem [resolvable:$true] %s59
      %65 = dma.hbm_to_vmem [thread:$0]  %s5, 1664, %s60, [#allocation9], 128, 128, 8
    $region25: #{tpu_custom_call.1} parent=1 // pred_fallthru
      _
    // Predicated region
    $region26: #{tpu_custom_call.1} parent=1 // pred_check
      _
    $region27: #{tpu_custom_call.1} parent=1 // pred_check_branch
      %67 = sbr.rel (0) target = $region29
    $region28: #{tpu_custom_call.1} parent=1 // pred_region
      _
    $region29: #{tpu_custom_call.1} parent=1 // pred_fallthru
      _
    // Predicated region
    $region30: #{tpu_custom_call.1} parent=1 // pred_check
      _
    $region31: #{tpu_custom_call.1} parent=1 // pred_check_branch
      %69 = sbr.rel (0) target = $region33
    $region32: #{tpu_custom_call.1} parent=1 // pred_region
      %70 = dma.done [#allocation3], 128
    $region33: #{tpu_custom_call.1} parent=1 // pred_fallthru
      _
    // Predicated region
    $region34: #{tpu_custom_call.1} parent=1 // pred_check
      _
    $region35: #{tpu_custom_call.1} parent=1 // pred_check_branch
      %72 = sbr.rel (0) target = $region37
    $region36: #{tpu_custom_call.1} parent=1 // pred_region
      %73 = dma.done [#allocation6], 128
    $region37: #{tpu_custom_call.1} parent=1 // pred_fallthru
      _
    // Predicated region
    $region38: #{tpu_custom_call.1} parent=1 // pred_check
      _
    $region39: #{tpu_custom_call.1} parent=1 // pred_check_branch
      %75 = sbr.rel (0) target = $region41
    $region40: #{tpu_custom_call.1} parent=1 // pred_region
      %76 = dma.done [#allocation6], 256
    $region41: #{tpu_custom_call.1} parent=1 // pred_fallthru
      _
    // Predicated region
    $region42: #{tpu_custom_call.1} parent=1 // pred_check
      _
    $region43: #{tpu_custom_call.1} parent=1 // pred_check_branch
      %78 = sbr.rel (0) target = $region45
    $region44: #{tpu_custom_call.1} parent=1 // pred_region
      %79 = dma.done [#allocation9], 1664
    $region45: #{tpu_custom_call.1} parent=1 // pred_fallthru
      _
    %v80 = vld [vmem:[#allocation2] sm:$0xff]
    %v81 = vld [vmem:[#allocation5] sm:$0xff]
    %v82 = vld [vmem:[%s2] sm:$0x1]
    %v84 = vlaneseq
    %v85 = vshrl.u32 %v84, 7
    %v86 = vsub.s32 0, %v85
    %v87 = vrot.slane %v82, %v86
    %vm89 = vcmask 64512
    %v91 = vsel %vm89, %v80, 0
    %93 = vmatprep.subr.mxu0 0.0
    %94 = vmatpush1.msra.mxu0 %v81
    %95 = vmatprep.subr.mxu0 0.0
    %96 = vmatpush1.msra.mxu0 0.0
    %97 = vmatprep.subr.mxu0 0.0
    %98 = vmatpush1.msra.mxu0 0.0
    %99 = vmatprep.subr.mxu0 0.0
    %100 = vmatpush1.msra.mxu0 0.0
    %101 = vmatprep.subr.mxu0 0.0
    %102 = vmatpush1.msra.mxu0 0.0
    %103 = vmatprep.subr.mxu0 0.0
    %104 = vmatpush1.msra.mxu0 0.0
    %105 = vmatprep.subr.mxu0 0.0
    %106 = vmatpush1.msra.mxu0 0.0
    %107 = vmatprep.subr.mxu0 0.0
    %108 = vmatpush1.msra.mxu0 0.0
    %109 = vmatprep.subr.mxu0 0.0
    %110 = vmatpush1.msra.mxu0 0.0
    %111 = vmatprep.subr.mxu0 0.0
    %112 = vmatpush1.msra.mxu0 0.0
    %113 = vmatprep.subr.mxu0 0.0
    %114 = vmatpush1.msra.mxu0 0.0
    %115 = vmatprep.subr.mxu0 0.0
    %116 = vmatpush1.msra.mxu0 0.0
    %117 = vmatprep.subr.mxu0 0.0
    %118 = vmatpush1.msra.mxu0 0.0
    %119 = vmatprep.subr.mxu0 0.0
    %120 = vmatpush1.msra.mxu0 0.0
    %121 = vmatprep.subr.mxu0 0.0
    %122 = vmatpush1.msra.mxu0 0.0
    %123 = vmatprep.subr.mxu0 0.0
    %124 = vmatpush1.msra.mxu0 0.0
    %125 = vmatprep.subr.mxu0 0.0
    %126 = vmatpush1.msra.mxu0 0.0
    %127 = vmatprep.subr.mxu0 0.0
    %128 = vmatpush1.msra.mxu0 0.0
    %129 = vmatprep.subr.mxu0 0.0
    %130 = vmatpush1.msra.mxu0 0.0
    %131 = vmatprep.subr.mxu0 0.0
    %132 = vmatpush1.msra.mxu0 0.0
    %133 = vmatprep.subr.mxu0 0.0
    %134 = vmatpush1.msra.mxu0 0.0
    %135 = vmatprep.subr.mxu0 0.0
    %136 = vmatpush1.msra.mxu0 0.0
    %137 = vmatprep.subr.mxu0 0.0
    %138 = vmatpush1.msra.mxu0 0.0
    %139 = vmatprep.subr.mxu0 0.0
    %140 = vmatpush1.msra.mxu0 0.0
    %141 = vmatprep.subr.mxu0 0.0
    %142 = vmatpush1.msra.mxu0 0.0
    %143 = vmatprep.subr.mxu0 0.0
    %144 = vmatpush1.msra.mxu0 0.0
    %145 = vmatprep.subr.mxu0 0.0
    %146 = vmatpush1.msra.mxu0 0.0
    %147 = vmatprep.subr.mxu0 0.0
    %148 = vmatpush1.msra.mxu0 0.0
    %149 = vmatprep.subr.mxu0 0.0
    %150 = vmatpush1.msra.mxu0 0.0
    %151 = vmatprep.subr.mxu0 0.0
    %152 = vmatpush1.msra.mxu0 0.0
    %153 = vmatprep.subr.mxu0 0.0
    %154 = vmatpush1.msra.mxu0 0.0
    %155 = vmatprep.subr.mxu0 0.0
    %156 = vmatpush1.msra.mxu0 0.0
    %157 = vmatprep.mubr.f32.mxu0 0.0
    %158 = vmatmul.mubr.f32.gmra.mrb[0].mxu0 %v91
    %v159 = vpop.f32.mrb[0].mxu0
    %v160 = vadd.f32 %v87, %v159
    %v161 = vpop.f32.mrb[0].mxu0
    %162 = vdwg.mxu0
    %v163 = vmax.f32 %v160, 0.0
    %v164 = vld [vmem:[#allocation7] sm:$0xff]
    %v165 = vld [vmem:[#allocation7 + $0x8] sm:$0x7f]
    %v166 = vld [vmem:[%s4] sm:$0x1]
    %v168 = vlaneseq
    %v169 = vshrl.u32 %v168, 7
    %v170 = vsub.s32 0, %v169
    %v171 = vrot.slane %v166, %v170
    %vm173 = vcmask 121856
    %v175 = vsel %vm173, %v163, 0
    %vm177 = vcmask 1046528
    %v179 = vsel %vm177, %v165, 0
    %181 = vmatprep.subr.mxu0 0.0
    %182 = vmatpush1.msra.mxu0 %v164
    %183 = vmatprep.subr.mxu0 0.0
    %184 = vmatpush1.msra.mxu0 %v179
    %185 = vmatprep.subr.mxu0 0.0
    %186 = vmatpush1.msra.mxu0 0.0
    %187 = vmatprep.subr.mxu0 0.0
    %188 = vmatpush1.msra.mxu0 0.0
    %189 = vmatprep.subr.mxu0 0.0
    %190 = vmatpush1.msra.mxu0 0.0
    %191 = vmatprep.subr.mxu0 0.0
    %192 = vmatpush1.msra.mxu0 0.0
    %193 = vmatprep.subr.mxu0 0.0
    %194 = vmatpush1.msra.mxu0 0.0
    %195 = vmatprep.subr.mxu0 0.0
    %196 = vmatpush1.msra.mxu0 0.0
    %197 = vmatprep.subr.mxu0 0.0
    %198 = vmatpush1.msra.mxu0 0.0
    %199 = vmatprep.subr.mxu0 0.0
    %200 = vmatpush1.msra.mxu0 0.0
    %201 = vmatprep.subr.mxu0 0.0
    %202 = vmatpush1.msra.mxu0 0.0
    %203 = vmatprep.subr.mxu0 0.0
    %204 = vmatpush1.msra.mxu0 0.0
    %205 = vmatprep.subr.mxu0 0.0
    %206 = vmatpush1.msra.mxu0 0.0
    %207 = vmatprep.subr.mxu0 0.0
    %208 = vmatpush1.msra.mxu0 0.0
    %209 = vmatprep.subr.mxu0 0.0
    %210 = vmatpush1.msra.mxu0 0.0
    %211 = vmatprep.subr.mxu0 0.0
    %212 = vmatpush1.msra.mxu0 0.0
    %213 = vmatprep.subr.mxu0 0.0
    %214 = vmatpush1.msra.mxu0 0.0
    %215 = vmatprep.subr.mxu0 0.0
    %216 = vmatpush1.msra.mxu0 0.0
    %217 = vmatprep.subr.mxu0 0.0
    %218 = vmatpush1.msra.mxu0 0.0
    %219 = vmatprep.subr.mxu0 0.0
    %220 = vmatpush1.msra.mxu0 0.0
    %221 = vmatprep.subr.mxu0 0.0
    %222 = vmatpush1.msra.mxu0 0.0
    %223 = vmatprep.subr.mxu0 0.0
    %224 = vmatpush1.msra.mxu0 0.0
    %225 = vmatprep.subr.mxu0 0.0
    %226 = vmatpush1.msra.mxu0 0.0
    %227 = vmatprep.subr.mxu0 0.0
    %228 = vmatpush1.msra.mxu0 0.0
    %229 = vmatprep.subr.mxu0 0.0
    %230 = vmatpush1.msra.mxu0 0.0
    %231 = vmatprep.subr.mxu0 0.0
    %232 = vmatpush1.msra.mxu0 0.0
    %233 = vmatprep.subr.mxu0 0.0
    %234 = vmatpush1.msra.mxu0 0.0
    %235 = vmatprep.subr.mxu0 0.0
    %236 = vmatpush1.msra.mxu0 0.0
    %237 = vmatprep.subr.mxu0 0.0
    %238 = vmatpush1.msra.mxu0 0.0
    %239 = vmatprep.subr.mxu0 0.0
    %240 = vmatpush1.msra.mxu0 0.0
    %241 = vmatprep.subr.mxu0 0.0
    %242 = vmatpush1.msra.mxu0 0.0
    %243 = vmatprep.subr.mxu0 0.0
    %244 = vmatpush1.msra.mxu0 0.0
    %245 = vmatprep.mubr.f32.mxu0 0.0
    %246 = vmatmul.mubr.f32.gmra.mrb[0].mxu0 %v175
    %v247 = vpop.f32.mrb[0].mxu0
    %v248 = vadd.f32 %v171, %v247
    %v249 = vpop.f32.mrb[0].mxu0
    %250 = vdwg.mxu0
    %v251 = vmax.f32 %v248, 0.0
    %v252 = vld [vmem:[#allocation8] sm:$0xff]
    %v253 = vld [vmem:[#allocation8 + $0x8] sm:$0xff]
    %v254 = vld [vmem:[#allocation8 + $0x10] sm:$0xff]
    %v255 = vld [vmem:[#allocation8 + $0x18] sm:$0xff]
    %v256 = vld [vmem:[#allocation8 + $0x20] sm:$0xff]
    %v257 = vld [vmem:[#allocation8 + $0x28] sm:$0xff]
    %v258 = vld [vmem:[#allocation8 + $0x30] sm:$0xff]
    %v259 = vld [vmem:[#allocation8 + $0x38] sm:$0xff]
    %v260 = vld [vmem:[#allocation8 + $0x40] sm:$0xff]
    %v261 = vld [vmem:[#allocation8 + $0x48] sm:$0xff]
    %v262 = vld [vmem:[#allocation8 + $0x50] sm:$0xff]
    %v263 = vld [vmem:[#allocation8 + $0x58] sm:$0xff]
    %v264 = vld [vmem:[#allocation8 + $0x60] sm:$0xf]
    %v265 = vld [vmem:[%s6] sm:$0x1]
    %v267 = vlaneseq
    %v268 = vshrl.u32 %v267, 7
    %v269 = vsub.s32 0, %v268
    %v270 = vrot.slane %v265, %v269
    %vm272 = vcmask 818176
    %v274 = vsel %vm272, %v251, 0
    %vm276 = vcmask 1043456
    %v278 = vsel %vm276, %v264, 0
    %280 = vmatprep.subr.mxu0 0.0
    %281 = vmatpush1.msra.mxu0 %v252
    %282 = vmatprep.subr.mxu0 0.0
    %283 = vmatpush1.msra.mxu0 %v253
    %284 = vmatprep.subr.mxu0 0.0
    %285 = vmatpush1.msra.mxu0 %v254
    %286 = vmatprep.subr.mxu0 0.0
    %287 = vmatpush1.msra.mxu0 %v255
    %288 = vmatprep.subr.mxu0 0.0
    %289 = vmatpush1.msra.mxu0 %v256
    %290 = vmatprep.subr.mxu0 0.0
    %291 = vmatpush1.msra.mxu0 %v257
    %292 = vmatprep.subr.mxu0 0.0
    %293 = vmatpush1.msra.mxu0 %v258
    %294 = vmatprep.subr.mxu0 0.0
    %295 = vmatpush1.msra.mxu0 %v259
    %296 = vmatprep.subr.mxu0 0.0
    %297 = vmatpush1.msra.mxu0 %v260
    %298 = vmatprep.subr.mxu0 0.0
    %299 = vmatpush1.msra.mxu0 %v261
    %300 = vmatprep.subr.mxu0 0.0
    %301 = vmatpush1.msra.mxu0 %v262
    %302 = vmatprep.subr.mxu0 0.0
    %303 = vmatpush1.msra.mxu0 %v263
    %304 = vmatprep.subr.mxu0 0.0
    %305 = vmatpush1.msra.mxu0 %v278
    %306 = vmatprep.subr.mxu0 0.0
    %307 = vmatpush1.msra.mxu0 0.0
    %308 = vmatprep.subr.mxu0 0.0
    %309 = vmatpush1.msra.mxu0 0.0
    %310 = vmatprep.subr.mxu0 0.0
    %311 = vmatpush1.msra.mxu0 0.0
    %312 = vmatprep.subr.mxu0 0.0
    %313 = vmatpush1.msra.mxu0 0.0
    %314 = vmatprep.subr.mxu0 0.0
    %315 = vmatpush1.msra.mxu0 0.0
    %316 = vmatprep.subr.mxu0 0.0
    %317 = vmatpush1.msra.mxu0 0.0
    %318 = vmatprep.subr.mxu0 0.0
    %319 = vmatpush1.msra.mxu0 0.0
    %320 = vmatprep.subr.mxu0 0.0
    %321 = vmatpush1.msra.mxu0 0.0
    %322 = vmatprep.subr.mxu0 0.0
    %323 = vmatpush1.msra.mxu0 0.0
    %324 = vmatprep.subr.mxu0 0.0
    %325 = vmatpush1.msra.mxu0 0.0
    %326 = vmatprep.subr.mxu0 0.0
    %327 = vmatpush1.msra.mxu0 0.0
    %328 = vmatprep.subr.mxu0 0.0
    %329 = vmatpush1.msra.mxu0 0.0
    %330 = vmatprep.subr.mxu0 0.0
    %331 = vmatpush1.msra.mxu0 0.0
    %332 = vmatprep.subr.mxu0 0.0
    %333 = vmatpush1.msra.mxu0 0.0
    %334 = vmatprep.subr.mxu0 0.0
    %335 = vmatpush1.msra.mxu0 0.0
    %336 = vmatprep.subr.mxu0 0.0
    %337 = vmatpush1.msra.mxu0 0.0
    %338 = vmatprep.subr.mxu0 0.0
    %339 = vmatpush1.msra.mxu0 0.0
    %340 = vmatprep.subr.mxu0 0.0
    %341 = vmatpush1.msra.mxu0 0.0
    %342 = vmatprep.subr.mxu0 0.0
    %343 = vmatpush1.msra.mxu0 0.0
    %344 = vmatprep.mubr.f32.mxu0 0.0
    %345 = vmatmul.mubr.f32.gmra.mrb[0].mxu0 %v274
    %v346 = vpop.f32.mrb[0].mxu0
    %v347 = vadd.f32 %v270, %v346
    %v348 = vpop.f32.mrb[0].mxu0
    %349 = vdwg.mxu0
    %350 = vmax.xlane.f32.xlu0 %v347
    %v351 = vpop.xlane.xlu0 %350
    %v352 = vsub.f32 %v347, %v351
    %v353 = vmul.f32 %v352, 1.442695
    %v354 = vpow.pop %v353
    %355 = vadd.xlane.f32.xlu0 %v354
    %v356 = vpop.xlane.xlu0 %355
    %v357 = vrcp.pop %v356
    %v358 = vmul.f32 %v354, %v357
    %vm359 = vcmask 31744
    %360 = vst.msk [vmem:[#allocation10] sm:$0xff] %vm359, %v358
    // Predicated region
    $region46: #{tpu_custom_call.1} parent=1 // pred_check
      _
    $region47: #{tpu_custom_call.1} parent=1 // pred_check_branch
      %362 = sbr.rel (0) target = $region49
    $region48: #{tpu_custom_call.1} parent=1 // pred_region
      %s364 = ssub.s32 128, 64
      %365 = vsyncadd [#allocation4], %s364
      %s366 = sshll.u32 [#allocation10], 4
      %s367 = int_to_ptr.vmem [resolvable:$true] %s366
      %372 = dma.vmem_to_hbm [thread:$0]  %s367, 64, %s7, [#allocation4], 64, 64, 4
    $region49: #{tpu_custom_call.1} parent=1 // pred_fallthru
      _
    // Predicated region
    $region50: #{tpu_custom_call.1} parent=1 // pred_check
      _
    $region51: #{tpu_custom_call.1} parent=1 // pred_check_branch
      %374 = sbr.rel (0) target = $region53
    $region52: #{tpu_custom_call.1} parent=1 // pred_region
      %375 = dma.done [#allocation4], 128
    $region53: #{tpu_custom_call.1} parent=1 // pred_fallthru
      _
    %376 = vsyncpa [#allocation3], 1
    %377 = vsyncpa [#allocation6], 1
    %378 = vsyncpa [#allocation9], 1
    %379 = vsyncpa [#allocation4], 1

</llo_original>
